<compile_context>
chip_gen: v5e
topology: v5e:2x2
jax: 0.10.0
libtpu: 0.0.40
codegen_flags: <defaults>
</compile_context>

<pallas_src>
import jax
import jax.numpy as jnp
from jax.experimental import pallas as pl
from jax.experimental.pallas import tpu as pltpu


def _round_up(x, m):
    return ((x + m - 1) // m) * m


def _cdiv(a, b):
    return (a + b - 1) // b


def mlp_kernel(x_ref, w1_ref, b1_ref, w2_ref, b2_ref,
               w3_ref, b3_ref, w4t_ref, b4t_ref, o_ref):
    # In-kernel cast to bf16 (avoids a separate padded bf16 copy of x in HBM).
    x = x_ref[...].astype(jnp.bfloat16)
    # Layer 1: [tb, in] @ [in, 512] -> f32 acc, bias + ReLU in f32.
    h = jnp.dot(x, w1_ref[...], preferred_element_type=jnp.float32)
    h = jnp.maximum(h + b1_ref[...], 0.0)
    # Layer 2: [tb, 512] @ [512, 256]
    h = jnp.dot(h.astype(jnp.bfloat16), w2_ref[...], preferred_element_type=jnp.float32)
    h = jnp.maximum(h + b2_ref[...], 0.0)
    # Layer 3: [tb, 256] @ [256, 128]
    h = jnp.dot(h.astype(jnp.bfloat16), w3_ref[...], preferred_element_type=jnp.float32)
    h = jnp.maximum(h + b3_ref[...], 0.0)                      # [tb, 128] f32
    # Layer 4 (transposed): [out_pad8, 128] @ [128, tb] -> [out_pad8, tb]
    # Batch lands on the lane axis, so the tiny real output (out_size cols) is stored as a
    # lane-dense 8-sublane slab instead of a 128-lane padded f32 row per batch element.
    y = jnp.dot(w4t_ref[...], h.astype(jnp.bfloat16).T,
                preferred_element_type=jnp.float32)
    o_ref[...] = (y + b4t_ref[...]).astype(o_ref.dtype)


def prepare_params(params):
    """One-time layout/dtype prep for the kernel (hoisted out of the per-call path).

    Returns bf16 weights (MXU inputs), f32 biases, and the transposed/row-padded layer-4
    weight/bias used by the lane-dense output path.
    """
    w1, b1, w2, b2, w3, b3, w4, b4 = params
    out_size = w4.shape[1]
    out_pad8 = _round_up(max(out_size, 8), 8)

    w1b = w1.astype(jnp.bfloat16)                              # [in, 512]
    w2b = w2.astype(jnp.bfloat16)                              # [512, 256]
    w3b = w3.astype(jnp.bfloat16)                              # [256, 128]
    # Layer 4 stored transposed and sublane-padded: [out_pad8, 128].
    w4t = jnp.zeros((out_pad8, 128), jnp.float32).at[:out_size, :].set(w4.T)
    w4t = w4t.astype(jnp.bfloat16)
    b4t = jnp.zeros((out_pad8, 1), jnp.float32).at[:out_size, 0].set(
        b4.reshape(-1).astype(jnp.float32))

    b1f = b1.reshape(1, -1).astype(jnp.float32)
    b2f = b2.reshape(1, -1).astype(jnp.float32)
    b3f = b3.reshape(1, -1).astype(jnp.float32)
    return (w1b, b1f, w2b, b2f, w3b, b3f, w4t, b4t, out_size)


def simple_dnn_forward(x, prepared, *, tile_b=1024):
    """x: [B, ...] flattened to [B, input_size]; returns [B, output_size] (f32)."""
    (w1b, b1, w2b, b2, w3b, b3, w4t, b4t, out_size) = prepared
    in_size = w1b.shape[0]
    out_pad8 = w4t.shape[0]

    B = x.shape[0]
    x2d = x.reshape(B, -1)                                     # x.view(x.size(0), -1)
    assert x2d.shape[1] == in_size, "input feature size mismatch with fc1"

    # Batch tiling.
    if B <= tile_b:
        tb = _round_up(B, 8)                                   # single full-extent tile
    else:
        # Lane-dense output blocks (tb multiple of 128); keep >= 2 grid steps so the
        # "parallel" axis can spread across both TensorCores on v7x.
        tb = min(_round_up(tile_b, 128), _round_up(_cdiv(B, 2), 128))
    b_pad = _round_up(B, tb)
    grid = (b_pad // tb,)

    # Only batch-rounding padding; no feature padding, no extra bf16 copy of x.
    if b_pad != B:
        x_in = jnp.zeros((b_pad, in_size), x2d.dtype).at[:B].set(x2d)
    else:
        x_in = x2d

    # Weights/biases: constant index_map -> DMA'd once, VMEM-resident across batch tiles.
    def resident(arr):
        return pl.BlockSpec(arr.shape, lambda i: (0, 0))

    flops = 2 * b_pad * (in_size * 512 + 512 * 256 + 256 * 128 + 128 * out_pad8)
    bytes_accessed = (
        x_in.size * x_in.dtype.itemsize
        + out_pad8 * b_pad * 4
        + sum(w.size * 2 for w in (w1b, w2b, w3b, w4t))
        + sum(b.size * 4 for b in (b1, b2, b3, b4t)))

    out = pl.pallas_call(
        mlp_kernel,
        out_shape=jax.ShapeDtypeStruct((out_pad8, b_pad), jnp.float32),
        grid=grid,
        in_specs=[
            pl.BlockSpec((tb, in_size), lambda i: (i, 0)),
            resident(w1b), resident(b1),
            resident(w2b), resident(b2),
            resident(w3b), resident(b3),
            resident(w4t), resident(b4t),
        ],
        out_specs=pl.BlockSpec((out_pad8, tb), lambda i: (0, i)),
        compiler_params=pltpu.CompilerParams(
            dimension_semantics=("parallel",),
            vmem_limit_bytes=48 * 1024 * 1024),
        cost_estimate=pl.CostEstimate(
            flops=flops, transcendentals=0, bytes_accessed=bytes_accessed),
    )(x_in, w1b, b1, w2b, b2, w3b, b3, w4t, b4t)

    return out[:out_size, :B].T


def init_params(key, input_size, output_size=1):
    """PyTorch-style init U(-1/sqrt(fan_in), 1/sqrt(fan_in)); weights stored [in, out]."""
    dims = [(input_size, 512), (512, 256), (256, 128), (128, output_size)]
    params = []
    for fan_in, fan_out in dims:
        key, kw, kb = jax.random.split(key, 3)
        bound = 1.0 / jnp.sqrt(fan_in)
        w = jax.random.uniform(kw, (fan_in, fan_out), jnp.float32, -bound, bound)
        b = jax.random.uniform(kb, (1, fan_out), jnp.float32, -bound, bound)
        params += [w, b]
    return params


def reference_forward(x, params):
    """Pure-JAX reference mirroring the kernel's numerics (bf16 matmul inputs, f32 accum)."""
    B = x.shape[0]
    h = x.reshape(B, -1).astype(jnp.float32)
    w1, b1, w2, b2, w3, b3, w4, b4 = params

    def dot_bf16(a, w):
        return jnp.dot(a.astype(jnp.bfloat16), w.astype(jnp.bfloat16),
                       preferred_element_type=jnp.float32)

    h = jnp.maximum(dot_bf16(h, w1) + b1, 0.0)
    h = jnp.maximum(dot_bf16(h, w2) + b2, 0.0)
    h = jnp.maximum(dot_bf16(h, w3) + b3, 0.0)
    return dot_bf16(h, w4) + b4


if __name__ == "__main__":
    key = jax.random.PRNGKey(0)
    key, kx = jax.random.split(key)

    batch, input_size, output_size = 8, 32, 1
    x = jax.random.normal(kx, (batch, input_size), jnp.float32)
    params = init_params(key, input_size, output_size)
    prepared = prepare_params(params)          # one-time weight prep (hoisted per review)

    out = simple_dnn_forward(x, prepared)
    out = jax.block_until_ready(out)
    ref = reference_forward(x, params)
    assert out.shape == (batch, output_size)
    assert jnp.allclose(out, ref, atol=1e-2, rtol=1e-2), "mismatch vs reference (small batch)"

    # Medium batch: single full-extent tile path.
    key, kx2 = jax.random.split(key)
    x_med = jax.random.normal(kx2, (300, input_size), jnp.float32)
    out_med = jax.block_until_ready(simple_dnn_forward(x_med, prepared))
    ref_med = reference_forward(x_med, params)
    assert out_med.shape == (300, output_size)
    assert jnp.allclose(out_med, ref_med, atol=1e-2, rtol=1e-2), "mismatch (medium batch)"

    # Large batch: exercises the 1024-row tiles, >=2 parallel grid steps, and batch padding.
    key, kx3 = jax.random.split(key)
    x_big = jax.random.normal(kx3, (2600, input_size), jnp.float32)
    out_big = jax.block_until_ready(simple_dnn_forward(x_big, prepared))
    ref_big = reference_forward(x_big, params)
    assert out_big.shape == (2600, output_size)
    assert jnp.allclose(out_big, ref_big, atol=1e-2, rtol=1e-2), "mismatch (tiled batch)"

    print("KERNEL_OK")
</pallas_src>

<mosaic_0001>
module attributes {stable_mosaic.version = 11 : i64} {
  func.func @mlp_kernel(%arg0: i32, %arg1: memref<8x32xf32, #tpu.memory_space<vmem>>, %arg2: memref<32x512xbf16, #tpu.memory_space<vmem>>, %arg3: memref<1x512xf32, #tpu.memory_space<vmem>>, %arg4: memref<512x256xbf16, #tpu.memory_space<vmem>>, %arg5: memref<1x256xf32, #tpu.memory_space<vmem>>, %arg6: memref<256x128xbf16, #tpu.memory_space<vmem>>, %arg7: memref<1x128xf32, #tpu.memory_space<vmem>>, %arg8: memref<8x128xbf16, #tpu.memory_space<vmem>>, %arg9: memref<8x1xf32, #tpu.memory_space<vmem>>, %arg10: memref<8x8xf32, #tpu.memory_space<vmem>>) attributes {dimension_semantics = [#tpu.dimension_semantics<parallel>], iteration_bounds = array<i64: 1>, scalar_prefetch = 0 : i64, scratch_operands = 0 : i64, tpu.core_type = #tpu.core_type<tc>, window_params = [{transform_indices = @transform_0, window_bounds = array<i64: 8, 32>}, {pipeline_mode = #tpu.pipeline_mode<synchronous>, transform_indices = @transform_1, window_bounds = array<i64: 32, 512>}, {pipeline_mode = #tpu.pipeline_mode<synchronous>, transform_indices = @transform_2, window_bounds = array<i64: 1, 512>}, {pipeline_mode = #tpu.pipeline_mode<synchronous>, transform_indices = @transform_3, window_bounds = array<i64: 512, 256>}, {pipeline_mode = #tpu.pipeline_mode<synchronous>, transform_indices = @transform_4, window_bounds = array<i64: 1, 256>}, {pipeline_mode = #tpu.pipeline_mode<synchronous>, transform_indices = @transform_5, window_bounds = array<i64: 256, 128>}, {pipeline_mode = #tpu.pipeline_mode<synchronous>, transform_indices = @transform_6, window_bounds = array<i64: 1, 128>}, {pipeline_mode = #tpu.pipeline_mode<synchronous>, transform_indices = @transform_7, window_bounds = array<i64: 8, 128>}, {pipeline_mode = #tpu.pipeline_mode<synchronous>, transform_indices = @transform_8, window_bounds = array<i64: 8, 1>}, {transform_indices = @transform_9, window_bounds = array<i64: 8, 8>}]} {
    %c0 = arith.constant 0 : index
    %c0_0 = arith.constant 0 : index
    %0 = vector.load %arg1[%c0, %c0_0] : memref<8x32xf32, #tpu.memory_space<vmem>>, vector<8x32xf32>
    %1 = arith.truncf %0 : vector<8x32xf32> to vector<8x32xbf16>
    %c0_1 = arith.constant 0 : index
    %c0_2 = arith.constant 0 : index
    %2 = vector.load %arg2[%c0_1, %c0_2] : memref<32x512xbf16, #tpu.memory_space<vmem>>, vector<32x512xbf16>
    %cst = arith.constant dense<0.000000e+00> : vector<8x512xf32>
    %3 = tpu.matmul %1, %2, %cst {dimension_numbers = #tpu.dot_dimension_numbers<[1], [0], [0], [1], [0, 0, 1, 1], [], []>} : vector<8x32xbf16>, vector<32x512xbf16>, vector<8x512xf32> -> vector<8x512xf32>
    %c0_3 = arith.constant 0 : index
    %c0_4 = arith.constant 0 : index
    %4 = vector.load %arg3[%c0_3, %c0_4] : memref<1x512xf32, #tpu.memory_space<vmem>>, vector<1x512xf32>
    %5 = vector.broadcast %4 : vector<1x512xf32> to vector<8x512xf32>
    %6 = arith.addf %3, %5 : vector<8x512xf32>
    %cst_5 = arith.constant 0.000000e+00 : f32
    %7 = vector.broadcast %cst_5 : f32 to vector<8x512xf32>
    %8 = arith.maximumf %6, %7 : vector<8x512xf32>
    %9 = arith.truncf %8 : vector<8x512xf32> to vector<8x512xbf16>
    %c0_6 = arith.constant 0 : index
    %c0_7 = arith.constant 0 : index
    %10 = vector.load %arg4[%c0_6, %c0_7] : memref<512x256xbf16, #tpu.memory_space<vmem>>, vector<512x256xbf16>
    %cst_8 = arith.constant dense<0.000000e+00> : vector<8x256xf32>
    %11 = tpu.matmul %9, %10, %cst_8 {dimension_numbers = #tpu.dot_dimension_numbers<[1], [0], [0], [1], [0, 0, 1, 1], [], []>} : vector<8x512xbf16>, vector<512x256xbf16>, vector<8x256xf32> -> vector<8x256xf32>
    %c0_9 = arith.constant 0 : index
    %c0_10 = arith.constant 0 : index
    %12 = vector.load %arg5[%c0_9, %c0_10] : memref<1x256xf32, #tpu.memory_space<vmem>>, vector<1x256xf32>
    %13 = vector.broadcast %12 : vector<1x256xf32> to vector<8x256xf32>
    %14 = arith.addf %11, %13 : vector<8x256xf32>
    %cst_11 = arith.constant 0.000000e+00 : f32
    %15 = vector.broadcast %cst_11 : f32 to vector<8x256xf32>
    %16 = arith.maximumf %14, %15 : vector<8x256xf32>
    %17 = arith.truncf %16 : vector<8x256xf32> to vector<8x256xbf16>
    %c0_12 = arith.constant 0 : index
    %c0_13 = arith.constant 0 : index
    %18 = vector.load %arg6[%c0_12, %c0_13] : memref<256x128xbf16, #tpu.memory_space<vmem>>, vector<256x128xbf16>
    %cst_14 = arith.constant dense<0.000000e+00> : vector<8x128xf32>
    %19 = tpu.matmul %17, %18, %cst_14 {dimension_numbers = #tpu.dot_dimension_numbers<[1], [0], [0], [1], [0, 0, 1, 1], [], []>} : vector<8x256xbf16>, vector<256x128xbf16>, vector<8x128xf32> -> vector<8x128xf32>
    %c0_15 = arith.constant 0 : index
    %c0_16 = arith.constant 0 : index
    %20 = vector.load %arg7[%c0_15, %c0_16] : memref<1x128xf32, #tpu.memory_space<vmem>>, vector<1x128xf32>
    %21 = vector.broadcast %20 : vector<1x128xf32> to vector<8x128xf32>
    %22 = arith.addf %19, %21 : vector<8x128xf32>
    %cst_17 = arith.constant 0.000000e+00 : f32
    %23 = vector.broadcast %cst_17 : f32 to vector<8x128xf32>
    %24 = arith.maximumf %22, %23 : vector<8x128xf32>
    %c0_18 = arith.constant 0 : index
    %c0_19 = arith.constant 0 : index
    %25 = vector.load %arg8[%c0_18, %c0_19] : memref<8x128xbf16, #tpu.memory_space<vmem>>, vector<8x128xbf16>
    %26 = arith.truncf %24 : vector<8x128xf32> to vector<8x128xbf16>
    %27 = tpu.transpose %26, [1, 0] : vector<8x128xbf16> -> vector<128x8xbf16>
    %cst_20 = arith.constant dense<0.000000e+00> : vector<8x8xf32>
    %28 = tpu.matmul %25, %27, %cst_20 {dimension_numbers = #tpu.dot_dimension_numbers<[1], [0], [0], [1], [0, 0, 1, 1], [], []>} : vector<8x128xbf16>, vector<128x8xbf16>, vector<8x8xf32> -> vector<8x8xf32>
    %c0_21 = arith.constant 0 : index
    %c0_22 = arith.constant 0 : index
    %29 = vector.load %arg9[%c0_21, %c0_22] : memref<8x1xf32, #tpu.memory_space<vmem>>, vector<8x1xf32>
    %30 = vector.broadcast %29 : vector<8x1xf32> to vector<8x8xf32>
    %31 = arith.addf %28, %30 : vector<8x8xf32>
    %c0_23 = arith.constant 0 : index
    %c0_24 = arith.constant 0 : index
    %32 = vector.load %arg10[%c0_23, %c0_24] : memref<8x8xf32, #tpu.memory_space<vmem>>, vector<8x8xf32>
    tpu.vector_store %arg10[%c0_23, %c0_24], %31 {strides = array<i32>} : memref<8x8xf32, #tpu.memory_space<vmem>>, vector<8x8xf32>,
    return
  }
  func.func @transform_0(%arg0: i32) -> (i32, i32) {
    %c0_i32 = arith.constant 0 : i32
    %c0_i32_0 = arith.constant 0 : i32
    return %arg0, %c0_i32 : i32, i32
  }
  func.func @transform_1(%arg0: i32) -> (i32, i32) {
    %c0_i32 = arith.constant 0 : i32
    %c0_i32_0 = arith.constant 0 : i32
    %c0_i32_1 = arith.constant 0 : i32
    return %c0_i32, %c0_i32_0 : i32, i32
  }
  func.func @transform_2(%arg0: i32) -> (i32, i32) {
    %c0_i32 = arith.constant 0 : i32
    %c0_i32_0 = arith.constant 0 : i32
    %c0_i32_1 = arith.constant 0 : i32
    return %c0_i32, %c0_i32_0 : i32, i32
  }
  func.func @transform_3(%arg0: i32) -> (i32, i32) {
    %c0_i32 = arith.constant 0 : i32
    %c0_i32_0 = arith.constant 0 : i32
    %c0_i32_1 = arith.constant 0 : i32
    return %c0_i32, %c0_i32_0 : i32, i32
  }
  func.func @transform_4(%arg0: i32) -> (i32, i32) {
    %c0_i32 = arith.constant 0 : i32
    %c0_i32_0 = arith.constant 0 : i32
    %c0_i32_1 = arith.constant 0 : i32
    return %c0_i32, %c0_i32_0 : i32, i32
  }
  func.func @transform_5(%arg0: i32) -> (i32, i32) {
    %c0_i32 = arith.constant 0 : i32
    %c0_i32_0 = arith.constant 0 : i32
    %c0_i32_1 = arith.constant 0 : i32
    return %c0_i32, %c0_i32_0 : i32, i32
  }
  func.func @transform_6(%arg0: i32) -> (i32, i32) {
    %c0_i32 = arith.constant 0 : i32
    %c0_i32_0 = arith.constant 0 : i32
    %c0_i32_1 = arith.constant 0 : i32
    return %c0_i32, %c0_i32_0 : i32, i32
  }
  func.func @transform_7(%arg0: i32) -> (i32, i32) {
    %c0_i32 = arith.constant 0 : i32
    %c0_i32_0 = arith.constant 0 : i32
    %c0_i32_1 = arith.constant 0 : i32
    return %c0_i32, %c0_i32_0 : i32, i32
  }
  func.func @transform_8(%arg0: i32) -> (i32, i32) {
    %c0_i32 = arith.constant 0 : i32
    %c0_i32_0 = arith.constant 0 : i32
    %c0_i32_1 = arith.constant 0 : i32
    return %c0_i32, %c0_i32_0 : i32, i32
  }
  func.func @transform_9(%arg0: i32) -> (i32, i32) {
    %c0_i32 = arith.constant 0 : i32
    %c0_i32_0 = arith.constant 0 : i32
    return %c0_i32, %arg0 : i32, i32
  }
}

</mosaic_0001>

<llo_original>
// kernel: tpu_custom_call.1
$region0: #{tpu_custom_call.1}
  #allocation0 [shape = 'u32[]', space=smem, size = 0x4, offset = 0x4, fixed_abs, tag = 'smem constant byte address 0x4 - core index']
  #allocation1 [shape = 'u32[72,128]{1,0:T(1,128)}', space=vmem, size = 0x9000, scoped, tag = 'internal scratch']
  %s0 = inlined_call_operand.vmem [shape: f32[8,32], index: 0, kind: input, shape index: {}]
  %s1 = inlined_call_operand.hbm [shape: bf16[32,512], index: 1, kind: input, shape index: {}]
  %s2 = inlined_call_operand.hbm [shape: f32[1,512], index: 2, kind: input, shape index: {}]
  %s3 = inlined_call_operand.hbm [shape: bf16[512,256], index: 3, kind: input, shape index: {}]
  %s4 = inlined_call_operand.hbm [shape: f32[1,256], index: 4, kind: input, shape index: {}]
  %s5 = inlined_call_operand.hbm [shape: bf16[256,128], index: 5, kind: input, shape index: {}]
  %s6 = inlined_call_operand.vmem [shape: f32[1,128], index: 6, kind: input, shape index: {}]
  %s7 = inlined_call_operand.vmem [shape: bf16[8,128], index: 7, kind: input, shape index: {}]
  %s8 = inlined_call_operand.vmem [shape: f32[8,1], index: 8, kind: input, shape index: {}]
  %s9 = inlined_call_operand.hbm [shape: f32[8,8], index: 9, kind: output, shape index: {}]
  %s10 = sld [smem:[#allocation0]]
  $region66: #{tpu_custom_call.1} parent=0
    _
  %s12 = ssub.s32 1, %s10
  %s13 = scalar_select 0, %s12, %s10
  $region1: #{tpu_custom_call.1} parent=0
    #allocation2 [shape = 'u8[32768]{0}', space=vmem, size = 0x8000, scoped, tag = 'input window, operand 1, single buffered']
    #allocation3 [shape = 's32[1]{0}', space=sflag, size = 0x4, scoped, tag = 'scoped memory for tpu_custom_call.1']
    #allocation4 [shape = 's32[1]{0}', space=sflag, size = 0x4, scoped, tag = 'scoped memory for tpu_custom_call.1']
    #allocation5 [shape = 'u8[2048]{0}', space=vmem, size = 0x800, scoped, tag = 'input window, operand 2, single buffered']
    #allocation6 [shape = 's32[1]{0}', space=sflag, size = 0x4, scoped, tag = 'scoped memory for tpu_custom_call.1']
    #allocation7 [shape = 'u8[262144]{0}', space=vmem, size = 0x40000, scoped, tag = 'input window, operand 3, single buffered']
    #allocation8 [shape = 'u8[1024]{0}', space=vmem, size = 0x400, scoped, tag = 'input window, operand 4, single buffered']
    #allocation9 [shape = 's32[1]{0}', space=sflag, size = 0x4, scoped, tag = 'scoped memory for tpu_custom_call.1']
    #allocation10 [shape = 'u8[65536]{0}', space=vmem, size = 0x10000, scoped, tag = 'input window, operand 5, single buffered']
    #allocation11 [shape = 'u8[4096]{0}', space=vmem, size = 0x1000, scoped, tag = 'output window, operand 0, single buffered']
    %14 = vsyncpa [#allocation3], 0
    %15 = vsyncpa [#allocation6], 0
    %16 = vsyncpa [#allocation9], 0
    %17 = vsyncpa [#allocation4], 0
    // Predicated region
    $region2: #{tpu_custom_call.1} parent=1 // pred_check
      _
    $region3: #{tpu_custom_call.1} parent=1 // pred_check_branch
      %19 = sbr.rel (0) target = $region5
    $region4: #{tpu_custom_call.1} parent=1 // pred_region
      _
    $region5: #{tpu_custom_call.1} parent=1 // pred_fallthru
      _
    // Predicated region
    $region6: #{tpu_custom_call.1} parent=1 // pred_check
      _
    $region7: #{tpu_custom_call.1} parent=1 // pred_check_branch
      %21 = sbr.rel (0) target = $region9
    $region8: #{tpu_custom_call.1} parent=1 // pred_region
      %23 = vsyncadd [#allocation3], 0
      %s24 = sshll.u32 %s1, 4
      %s25 = int_to_ptr.hbm [resolvable:$true] %s24
      %s26 = sshll.u32 [#allocation2], 4
      %s27 = int_to_ptr.vmem [resolvable:$true] %s26
      %32 = dma.hbm_to_vmem [thread:$0]  %s25, 1024, %s27, [#allocation3], 256, 256, 16
    $region9: #{tpu_custom_call.1} parent=1 // pred_fallthru
      _
    // Predicated region
    $region10: #{tpu_custom_call.1} parent=1 // pred_check
      _
    $region11: #{tpu_custom_call.1} parent=1 // pred_check_branch
      %34 = sbr.rel (0) target = $region13
    $region12: #{tpu_custom_call.1} parent=1 // pred_region
      %36 = vsyncadd [#allocation6], 0
      %s38 = sshll.u32 %s2, 4
      %s39 = int_to_ptr.hbm [resolvable:$true] %s38
      %s40 = sshll.u32 [#allocation5], 4
      %s41 = int_to_ptr.vmem [resolvable:$true] %s40
      %43 = dma.hbm_to_vmem [thread:$0]  %s39, 64, %s41, [#allocation6]
    $region13: #{tpu_custom_call.1} parent=1 // pred_fallthru
      _
    // Predicated region
    $region14: #{tpu_custom_call.1} parent=1 // pred_check
      _
    $region15: #{tpu_custom_call.1} parent=1 // pred_check_branch
      %45 = sbr.rel (0) target = $region17
    $region16: #{tpu_custom_call.1} parent=1 // pred_region
      %47 = vsyncadd [#allocation6], 0
      %s48 = sshll.u32 %s3, 4
      %s49 = int_to_ptr.hbm [resolvable:$true] %s48
      %s50 = sshll.u32 [#allocation7], 4
      %s51 = int_to_ptr.vmem [resolvable:$true] %s50
      %56 = dma.hbm_to_vmem [thread:$0]  %s49, 8192, %s51, [#allocation6], 128, 128, 8
    $region17: #{tpu_custom_call.1} parent=1 // pred_fallthru
      _
    // Predicated region
    $region18: #{tpu_custom_call.1} parent=1 // pred_check
      _
    $region19: #{tpu_custom_call.1} parent=1 // pred_check_branch
      %58 = sbr.rel (0) target = $region21
    $region20: #{tpu_custom_call.1} parent=1 // pred_region
      %60 = vsyncadd [#allocation9], 0
      %s62 = sshll.u32 %s4, 4
      %s63 = int_to_ptr.hbm [resolvable:$true] %s62
      %s64 = sshll.u32 [#allocation8], 4
      %s65 = int_to_ptr.vmem [resolvable:$true] %s64
      %67 = dma.hbm_to_vmem [thread:$0]  %s63, 32, %s65, [#allocation9]
    $region21: #{tpu_custom_call.1} parent=1 // pred_fallthru
      _
    // Predicated region
    $region22: #{tpu_custom_call.1} parent=1 // pred_check
      _
    $region23: #{tpu_custom_call.1} parent=1 // pred_check_branch
      %69 = sbr.rel (0) target = $region25
    $region24: #{tpu_custom_call.1} parent=1 // pred_region
      %71 = vsyncadd [#allocation9], 0
      %s72 = sshll.u32 %s5, 4
      %s73 = int_to_ptr.hbm [resolvable:$true] %s72
      %s74 = sshll.u32 [#allocation10], 4
      %s75 = int_to_ptr.vmem [resolvable:$true] %s74
      %80 = dma.hbm_to_vmem [thread:$0]  %s73, 2048, %s75, [#allocation9], 64, 64, 4
    $region25: #{tpu_custom_call.1} parent=1 // pred_fallthru
      _
    // Predicated region
    $region26: #{tpu_custom_call.1} parent=1 // pred_check
      _
    $region27: #{tpu_custom_call.1} parent=1 // pred_check_branch
      %82 = sbr.rel (0) target = $region29
    $region28: #{tpu_custom_call.1} parent=1 // pred_region
      _
    $region29: #{tpu_custom_call.1} parent=1 // pred_fallthru
      _
    // Predicated region
    $region30: #{tpu_custom_call.1} parent=1 // pred_check
      _
    $region31: #{tpu_custom_call.1} parent=1 // pred_check_branch
      %84 = sbr.rel (0) target = $region33
    $region32: #{tpu_custom_call.1} parent=1 // pred_region
      _
    $region33: #{tpu_custom_call.1} parent=1 // pred_fallthru
      _
    // Predicated region
    $region34: #{tpu_custom_call.1} parent=1 // pred_check
      _
    $region35: #{tpu_custom_call.1} parent=1 // pred_check_branch
      %86 = sbr.rel (0) target = $region37
    $region36: #{tpu_custom_call.1} parent=1 // pred_region
      _
    $region37: #{tpu_custom_call.1} parent=1 // pred_fallthru
      _
    // Predicated region
    $region38: #{tpu_custom_call.1} parent=1 // pred_check
      _
    $region39: #{tpu_custom_call.1} parent=1 // pred_check_branch
      %88 = sbr.rel (0) target = $region41
    $region40: #{tpu_custom_call.1} parent=1 // pred_region
      %90 = dma.done [#allocation3], 1024
    $region41: #{tpu_custom_call.1} parent=1 // pred_fallthru
      _
    // Predicated region
    $region42: #{tpu_custom_call.1} parent=1 // pred_check
      _
    $region43: #{tpu_custom_call.1} parent=1 // pred_check_branch
      %92 = sbr.rel (0) target = $region45
    $region44: #{tpu_custom_call.1} parent=1 // pred_region
      %94 = dma.done [#allocation6], 64
    $region45: #{tpu_custom_call.1} parent=1 // pred_fallthru
      _
    // Predicated region
    $region46: #{tpu_custom_call.1} parent=1 // pred_check
      _
    $region47: #{tpu_custom_call.1} parent=1 // pred_check_branch
      %96 = sbr.rel (0) target = $region49
    $region48: #{tpu_custom_call.1} parent=1 // pred_region
      %98 = dma.done [#allocation6], 8192
    $region49: #{tpu_custom_call.1} parent=1 // pred_fallthru
      _
    // Predicated region
    $region50: #{tpu_custom_call.1} parent=1 // pred_check
      _
    $region51: #{tpu_custom_call.1} parent=1 // pred_check_branch
      %100 = sbr.rel (0) target = $region53
    $region52: #{tpu_custom_call.1} parent=1 // pred_region
      %102 = dma.done [#allocation9], 32
    $region53: #{tpu_custom_call.1} parent=1 // pred_fallthru
      _
    // Predicated region
    $region54: #{tpu_custom_call.1} parent=1 // pred_check
      _
    $region55: #{tpu_custom_call.1} parent=1 // pred_check_branch
      %104 = sbr.rel (0) target = $region57
    $region56: #{tpu_custom_call.1} parent=1 // pred_region
      %106 = dma.done [#allocation9], 2048
    $region57: #{tpu_custom_call.1} parent=1 // pred_fallthru
      _
    %v108 = vld [vmem:[%s0] sm:$0xff]
    %v109 = vpack.c.bf16 %v108, %v108
    %v110 = vld [vmem:[#allocation2] sm:$0xff]
    %v111 = vld [vmem:[#allocation2 + $0x8] sm:$0xff]
    %v112 = vld [vmem:[#allocation2 + $0x10] sm:$0xff]
    %v113 = vld [vmem:[#allocation2 + $0x18] sm:$0xff]
    %v114 = vld [vmem:[#allocation2 + $0x20] sm:$0xff]
    %v115 = vld [vmem:[#allocation2 + $0x28] sm:$0xff]
    %v116 = vld [vmem:[#allocation2 + $0x30] sm:$0xff]
    %v117 = vld [vmem:[#allocation2 + $0x38] sm:$0xff]
    %v118 = vld [vmem:[#allocation5] sm:$0xf]
    %v120 = vperm.slane %v118, 0
    %v121 = vperm.slane %v118, 1
    %v122 = vperm.slane %v118, 2
    %v123 = vperm.slane %v118, 3
    %v136 = vunpack.c.l.b16 %v110
    %v137 = vunpack.c.h.b16 %v110
    %v138 = vunpack.c.l.b16 %v111
    %v139 = vunpack.c.h.b16 %v111
    %v140 = vunpack.c.l.b16 %v112
    %v141 = vunpack.c.h.b16 %v112
    %v142 = vunpack.c.l.b16 %v113
    %v143 = vunpack.c.h.b16 %v113
    %v144 = vunpack.c.l.b16 %v114
    %v145 = vunpack.c.h.b16 %v114
    %v146 = vunpack.c.l.b16 %v115
    %v147 = vunpack.c.h.b16 %v115
    %v148 = vunpack.c.l.b16 %v116
    %v149 = vunpack.c.h.b16 %v116
    %v150 = vunpack.c.l.b16 %v117
    %v151 = vunpack.c.h.b16 %v117
    %v152 = vpack.c.b16 %v140, %v136
    %v153 = vpack.c.b16 %v141, %v137
    %v154 = vpack.c.b16 %v142, %v138
    %v155 = vpack.c.b16 %v143, %v139
    %v156 = vpack.c.b16 %v148, %v144
    %v157 = vpack.c.b16 %v149, %v145
    %v158 = vpack.c.b16 %v150, %v146
    %v159 = vpack.c.b16 %v151, %v147
    %vm168 = vcmask 261120
    %v170 = vsel %vm168, %v109, 0
    %172 = vmatpush.bf16.msra.mxu0 0
    %173 = vmatpush.bf16.msra.mxu0 0
    %174 = vmatpush.bf16.msra.mxu0 0
    %175 = vmatpush.bf16.msra.mxu0 0
    %176 = vmatpush.bf16.msra.mxu0 0
    %177 = vmatpush.bf16.msra.mxu0 0
    %178 = vmatpush.bf16.msra.mxu0 %v156
    %179 = vmatpush.bf16.msra.mxu0 %v152
    %180 = vmatmul.bf16.gmra.mxu0 %v170
    %v181 = vpop.f32.mrf.mxu0
    %v182 = vadd.f32 %v120, %v181
    %v183 = vpop.f32.mrf.mxu0
    %184 = vdwg.mxu0
    %185 = vmatpush.bf16.msra.mxu0 0
    %186 = vmatpush.bf16.msra.mxu0 0
    %187 = vmatpush.bf16.msra.mxu0 0
    %188 = vmatpush.bf16.msra.mxu0 0
    %189 = vmatpush.bf16.msra.mxu0 0
    %190 = vmatpush.bf16.msra.mxu0 0
    %191 = vmatpush.bf16.msra.mxu0 %v157
    %192 = vmatpush.bf16.msra.mxu0 %v153
    %193 = vmatmul.bf16.gmra.mxu0 %v170
    %v194 = vpop.f32.mrf.mxu0
    %v195 = vadd.f32 %v121, %v194
    %v196 = vpop.f32.mrf.mxu0
    %197 = vdwg.mxu0
    %198 = vmatpush.bf16.msra.mxu0 0
    %199 = vmatpush.bf16.msra.mxu0 0
    %200 = vmatpush.bf16.msra.mxu0 0
    %201 = vmatpush.bf16.msra.mxu0 0
    %202 = vmatpush.bf16.msra.mxu0 0
    %203 = vmatpush.bf16.msra.mxu0 0
    %204 = vmatpush.bf16.msra.mxu0 %v158
    %205 = vmatpush.bf16.msra.mxu0 %v154
    %206 = vmatmul.bf16.gmra.mxu0 %v170
    %v207 = vpop.f32.mrf.mxu0
    %v208 = vadd.f32 %v122, %v207
    %v209 = vpop.f32.mrf.mxu0
    %210 = vdwg.mxu0
    %211 = vmatpush.bf16.msra.mxu0 0
    %212 = vmatpush.bf16.msra.mxu0 0
    %213 = vmatpush.bf16.msra.mxu0 0
    %214 = vmatpush.bf16.msra.mxu0 0
    %215 = vmatpush.bf16.msra.mxu0 0
    %216 = vmatpush.bf16.msra.mxu0 0
    %217 = vmatpush.bf16.msra.mxu0 %v159
    %218 = vmatpush.bf16.msra.mxu0 %v155
    %219 = vmatmul.bf16.gmra.mxu0 %v170
    %v220 = vpop.f32.mrf.mxu0
    %v221 = vadd.f32 %v123, %v220
    %v222 = vpop.f32.mrf.mxu0
    %223 = vdwg.mxu0
    %v224 = vmax.f32 %v182, 0.0
    %v225 = vmax.f32 %v195, 0.0
    %v226 = vmax.f32 %v208, 0.0
    %v227 = vmax.f32 %v221, 0.0
    %v228 = vpack.c.bf16 %v224, %v224
    %v229 = vpack.c.bf16 %v225, %v225
    %v230 = vpack.c.bf16 %v226, %v226
    %v231 = vpack.c.bf16 %v227, %v227
    %v232 = vld [vmem:[#allocation7] sm:$0xff]
    %v233 = vld [vmem:[#allocation7 + $0x8] sm:$0xff]
    %v234 = vld [vmem:[#allocation7 + $0x10] sm:$0xff]
    %v235 = vld [vmem:[#allocation7 + $0x18] sm:$0xff]
    %v236 = vld [vmem:[#allocation7 + $0x20] sm:$0xff]
    %v237 = vld [vmem:[#allocation7 + $0x28] sm:$0xff]
    %v238 = vld [vmem:[#allocation7 + $0x30] sm:$0xff]
    %v239 = vld [vmem:[#allocation7 + $0x38] sm:$0xff]
    %v240 = vld [vmem:[#allocation7 + $0x40] sm:$0xff]
    %v241 = vld [vmem:[#allocation7 + $0x48] sm:$0xff]
    %v242 = vld [vmem:[#allocation7 + $0x50] sm:$0xff]
    %v243 = vld [vmem:[#allocation7 + $0x58] sm:$0xff]
    %v244 = vld [vmem:[#allocation7 + $0x60] sm:$0xff]
    %v245 = vld [vmem:[#allocation7 + $0x68] sm:$0xff]
    %v246 = vld [vmem:[#allocation7 + $0x70] sm:$0xff]
    %v247 = vld [vmem:[#allocation7 + $0x78] sm:$0xff]
    %v248 = vld [vmem:[#allocation7 + $0x80] sm:$0xff]
    %v249 = vld [vmem:[#allocation7 + $0x88] sm:$0xff]
    %v250 = vld [vmem:[#allocation7 + $0x90] sm:$0xff]
    %v251 = vld [vmem:[#allocation7 + $0x98] sm:$0xff]
    %v252 = vld [vmem:[#allocation7 + $0xa0] sm:$0xff]
    %v253 = vld [vmem:[#allocation7 + $0xa8] sm:$0xff]
    %v254 = vld [vmem:[#allocation7 + $0xb0] sm:$0xff]
    %v255 = vld [vmem:[#allocation7 + $0xb8] sm:$0xff]
    %v256 = vld [vmem:[#allocation7 + $0xc0] sm:$0xff]
    %v257 = vld [vmem:[#allocation7 + $0xc8] sm:$0xff]
    %v258 = vld [vmem:[#allocation7 + $0xd0] sm:$0xff]
    %v259 = vld [vmem:[#allocation7 + $0xd8] sm:$0xff]
    %v260 = vld [vmem:[#allocation7 + $0xe0] sm:$0xff]
    %v261 = vld [vmem:[#allocation7 + $0xe8] sm:$0xff]
    %v262 = vld [vmem:[#allocation7 + $0xf0] sm:$0xff]
    %v263 = vld [vmem:[#allocation7 + $0xf8] sm:$0xff]
    %v264 = vld [vmem:[#allocation7 + $0x100] sm:$0xff]
    %v265 = vld [vmem:[#allocation7 + $0x108] sm:$0xff]
    %v266 = vld [vmem:[#allocation7 + $0x110] sm:$0xff]
    %v267 = vld [vmem:[#allocation7 + $0x118] sm:$0xff]
    %v268 = vld [vmem:[#allocation7 + $0x120] sm:$0xff]
    %v269 = vld [vmem:[#allocation7 + $0x128] sm:$0xff]
    %v270 = vld [vmem:[#allocation7 + $0x130] sm:$0xff]
    %v271 = vld [vmem:[#allocation7 + $0x138] sm:$0xff]
    %v272 = vld [vmem:[#allocation7 + $0x140] sm:$0xff]
    %v273 = vld [vmem:[#allocation7 + $0x148] sm:$0xff]
    %v274 = vld [vmem:[#allocation7 + $0x150] sm:$0xff]
    %v275 = vld [vmem:[#allocation7 + $0x158] sm:$0xff]
    %v276 = vld [vmem:[#allocation7 + $0x160] sm:$0xff]
    %v277 = vld [vmem:[#allocation7 + $0x168] sm:$0xff]
    %v278 = vld [vmem:[#allocation7 + $0x170] sm:$0xff]
    %v279 = vld [vmem:[#allocation7 + $0x178] sm:$0xff]
    %v280 = vld [vmem:[#allocation7 + $0x180] sm:$0xff]
    %v281 = vld [vmem:[#allocation7 + $0x188] sm:$0xff]
    %v282 = vld [vmem:[#allocation7 + $0x190] sm:$0xff]
    %v283 = vld [vmem:[#allocation7 + $0x198] sm:$0xff]
    %v284 = vld [vmem:[#allocation7 + $0x1a0] sm:$0xff]
    %v285 = vld [vmem:[#allocation7 + $0x1a8] sm:$0xff]
    %v286 = vld [vmem:[#allocation7 + $0x1b0] sm:$0xff]
    %v287 = vld [vmem:[#allocation7 + $0x1b8] sm:$0xff]
    %v288 = vld [vmem:[#allocation7 + $0x1c0] sm:$0xff]
    %v289 = vld [vmem:[#allocation7 + $0x1c8] sm:$0xff]
    %v290 = vld [vmem:[#allocation7 + $0x1d0] sm:$0xff]
    %v291 = vld [vmem:[#allocation7 + $0x1d8] sm:$0xff]
    %v292 = vld [vmem:[#allocation7 + $0x1e0] sm:$0xff]
    %v293 = vld [vmem:[#allocation7 + $0x1e8] sm:$0xff]
    %v294 = vld [vmem:[#allocation7 + $0x1f0] sm:$0xff]
    %v295 = vld [vmem:[#allocation7 + $0x1f8] sm:$0xff]
    %v296 = vld [vmem:[#allocation8] sm:$0x3]
    %v298 = vperm.slane %v296, 0
    %v299 = vperm.slane %v296, 1
    %v366 = vunpack.c.l.b16 %v232
    %v367 = vunpack.c.h.b16 %v232
    %v368 = vunpack.c.l.b16 %v233
    %v369 = vunpack.c.h.b16 %v233
    %v370 = vunpack.c.l.b16 %v234
    %v371 = vunpack.c.h.b16 %v234
    %v372 = vunpack.c.l.b16 %v235
    %v373 = vunpack.c.h.b16 %v235
    %v374 = vunpack.c.l.b16 %v236
    %v375 = vunpack.c.h.b16 %v236
    %v376 = vunpack.c.l.b16 %v237
    %v377 = vunpack.c.h.b16 %v237
    %v378 = vunpack.c.l.b16 %v238
    %v379 = vunpack.c.h.b16 %v238
    %v380 = vunpack.c.l.b16 %v239
    %v381 = vunpack.c.h.b16 %v239
    %v382 = vunpack.c.l.b16 %v240
    %v383 = vunpack.c.h.b16 %v240
    %v384 = vunpack.c.l.b16 %v241
    %v385 = vunpack.c.h.b16 %v241
    %v386 = vunpack.c.l.b16 %v242
    %v387 = vunpack.c.h.b16 %v242
    %v388 = vunpack.c.l.b16 %v243
    %v389 = vunpack.c.h.b16 %v243
    %v390 = vunpack.c.l.b16 %v244
    %v391 = vunpack.c.h.b16 %v244
    %v392 = vunpack.c.l.b16 %v245
    %v393 = vunpack.c.h.b16 %v245
    %v394 = vunpack.c.l.b16 %v246
    %v395 = vunpack.c.h.b16 %v246
    %v396 = vunpack.c.l.b16 %v247
    %v397 = vunpack.c.h.b16 %v247
    %v398 = vunpack.c.l.b16 %v248
    %v399 = vunpack.c.h.b16 %v248
    %v400 = vunpack.c.l.b16 %v249
    %v401 = vunpack.c.h.b16 %v249
    %v402 = vunpack.c.l.b16 %v250
    %v403 = vunpack.c.h.b16 %v250
    %v404 = vunpack.c.l.b16 %v251
    %v405 = vunpack.c.h.b16 %v251
    %v406 = vunpack.c.l.b16 %v252
    %v407 = vunpack.c.h.b16 %v252
    %v408 = vunpack.c.l.b16 %v253
    %v409 = vunpack.c.h.b16 %v253
    %v410 = vunpack.c.l.b16 %v254
    %v411 = vunpack.c.h.b16 %v254
    %v412 = vunpack.c.l.b16 %v255
    %v413 = vunpack.c.h.b16 %v255
    %v414 = vunpack.c.l.b16 %v256
    %v415 = vunpack.c.h.b16 %v256
    %v416 = vunpack.c.l.b16 %v257
    %v417 = vunpack.c.h.b16 %v257
    %v418 = vunpack.c.l.b16 %v258
    %v419 = vunpack.c.h.b16 %v258
    %v420 = vunpack.c.l.b16 %v259
    %v421 = vunpack.c.h.b16 %v259
    %v422 = vunpack.c.l.b16 %v260
    %v423 = vunpack.c.h.b16 %v260
    %v424 = vunpack.c.l.b16 %v261
    %v425 = vunpack.c.h.b16 %v261
    %v426 = vunpack.c.l.b16 %v262
    %v427 = vunpack.c.h.b16 %v262
    %v428 = vunpack.c.l.b16 %v263
    %v429 = vunpack.c.h.b16 %v263
    %v430 = vunpack.c.l.b16 %v264
    %v431 = vunpack.c.h.b16 %v264
    %v432 = vunpack.c.l.b16 %v265
    %v433 = vunpack.c.h.b16 %v265
    %v434 = vunpack.c.l.b16 %v266
    %v435 = vunpack.c.h.b16 %v266
    %v436 = vunpack.c.l.b16 %v267
    %v437 = vunpack.c.h.b16 %v267
    %v438 = vunpack.c.l.b16 %v268
    %v439 = vunpack.c.h.b16 %v268
    %v440 = vunpack.c.l.b16 %v269
    %v441 = vunpack.c.h.b16 %v269
    %v442 = vunpack.c.l.b16 %v270
    %v443 = vunpack.c.h.b16 %v270
    %v444 = vunpack.c.l.b16 %v271
    %v445 = vunpack.c.h.b16 %v271
    %v446 = vunpack.c.l.b16 %v272
    %v447 = vunpack.c.h.b16 %v272
    %v448 = vunpack.c.l.b16 %v273
    %v449 = vunpack.c.h.b16 %v273
    %v450 = vunpack.c.l.b16 %v274
    %v451 = vunpack.c.h.b16 %v274
    %v452 = vunpack.c.l.b16 %v275
    %v453 = vunpack.c.h.b16 %v275
    %v454 = vunpack.c.l.b16 %v276
    %v455 = vunpack.c.h.b16 %v276
    %v456 = vunpack.c.l.b16 %v277
    %v457 = vunpack.c.h.b16 %v277
    %v458 = vunpack.c.l.b16 %v278
    %v459 = vunpack.c.h.b16 %v278
    %v460 = vunpack.c.l.b16 %v279
    %v461 = vunpack.c.h.b16 %v279
    %v462 = vunpack.c.l.b16 %v280
    %v463 = vunpack.c.h.b16 %v280
    %v464 = vunpack.c.l.b16 %v281
    %v465 = vunpack.c.h.b16 %v281
    %v466 = vunpack.c.l.b16 %v282
    %v467 = vunpack.c.h.b16 %v282
    %v468 = vunpack.c.l.b16 %v283
    %v469 = vunpack.c.h.b16 %v283
    %v470 = vunpack.c.l.b16 %v284
    %v471 = vunpack.c.h.b16 %v284
    %v472 = vunpack.c.l.b16 %v285
    %v473 = vunpack.c.h.b16 %v285
    %v474 = vunpack.c.l.b16 %v286
    %v475 = vunpack.c.h.b16 %v286
    %v476 = vunpack.c.l.b16 %v287
    %v477 = vunpack.c.h.b16 %v287
    %v478 = vunpack.c.l.b16 %v288
    %v479 = vunpack.c.h.b16 %v288
    %v480 = vunpack.c.l.b16 %v289
    %v481 = vunpack.c.h.b16 %v289
    %v482 = vunpack.c.l.b16 %v290
    %v483 = vunpack.c.h.b16 %v290
    %v484 = vunpack.c.l.b16 %v291
    %v485 = vunpack.c.h.b16 %v291
    %v486 = vunpack.c.l.b16 %v292
    %v487 = vunpack.c.h.b16 %v292
    %v488 = vunpack.c.l.b16 %v293
    %v489 = vunpack.c.h.b16 %v293
    %v490 = vunpack.c.l.b16 %v294
    %v491 = vunpack.c.h.b16 %v294
    %v492 = vunpack.c.l.b16 %v295
    %v493 = vunpack.c.h.b16 %v295
    %v494 = vpack.c.b16 %v368, %v366
    %v495 = vpack.c.b16 %v369, %v367
    %v496 = vpack.c.b16 %v372, %v370
    %v497 = vpack.c.b16 %v373, %v371
    %v498 = vpack.c.b16 %v376, %v374
    %v499 = vpack.c.b16 %v377, %v375
    %v500 = vpack.c.b16 %v380, %v378
    %v501 = vpack.c.b16 %v381, %v379
    %v502 = vpack.c.b16 %v384, %v382
    %v503 = vpack.c.b16 %v385, %v383
    %v504 = vpack.c.b16 %v388, %v386
    %v505 = vpack.c.b16 %v389, %v387
    %v506 = vpack.c.b16 %v392, %v390
    %v507 = vpack.c.b16 %v393, %v391
    %v508 = vpack.c.b16 %v396, %v394
    %v509 = vpack.c.b16 %v397, %v395
    %v510 = vpack.c.b16 %v400, %v398
    %v511 = vpack.c.b16 %v401, %v399
    %v512 = vpack.c.b16 %v404, %v402
    %v513 = vpack.c.b16 %v405, %v403
    %v514 = vpack.c.b16 %v408, %v406
    %v515 = vpack.c.b16 %v409, %v407
    %v516 = vpack.c.b16 %v412, %v410
    %v517 = vpack.c.b16 %v413, %v411
    %v518 = vpack.c.b16 %v416, %v414
    %v519 = vpack.c.b16 %v417, %v415
    %v520 = vpack.c.b16 %v420, %v418
    %v521 = vpack.c.b16 %v421, %v419
    %v522 = vpack.c.b16 %v424, %v422
    %v523 = vpack.c.b16 %v425, %v423
    %v524 = vpack.c.b16 %v428, %v426
    %v525 = vpack.c.b16 %v429, %v427
    %v526 = vpack.c.b16 %v432, %v430
    %v527 = vpack.c.b16 %v433, %v431
    %v528 = vpack.c.b16 %v436, %v434
    %v529 = vpack.c.b16 %v437, %v435
    %v530 = vpack.c.b16 %v440, %v438
    %v531 = vpack.c.b16 %v441, %v439
    %v532 = vpack.c.b16 %v444, %v442
    %v533 = vpack.c.b16 %v445, %v443
    %v534 = vpack.c.b16 %v448, %v446
    %v535 = vpack.c.b16 %v449, %v447
    %v536 = vpack.c.b16 %v452, %v450
    %v537 = vpack.c.b16 %v453, %v451
    %v538 = vpack.c.b16 %v456, %v454
    %v539 = vpack.c.b16 %v457, %v455
    %v540 = vpack.c.b16 %v460, %v458
    %v541 = vpack.c.b16 %v461, %v459
    %v542 = vpack.c.b16 %v464, %v462
    %v543 = vpack.c.b16 %v465, %v463
    %v544 = vpack.c.b16 %v468, %v466
    %v545 = vpack.c.b16 %v469, %v467
    %v546 = vpack.c.b16 %v472, %v470
    %v547 = vpack.c.b16 %v473, %v471
    %v548 = vpack.c.b16 %v476, %v474
    %v549 = vpack.c.b16 %v477, %v475
    %v550 = vpack.c.b16 %v480, %v478
    %v551 = vpack.c.b16 %v481, %v479
    %v552 = vpack.c.b16 %v484, %v482
    %v553 = vpack.c.b16 %v485, %v483
    %v554 = vpack.c.b16 %v488, %v486
    %v555 = vpack.c.b16 %v489, %v487
    %v556 = vpack.c.b16 %v492, %v490
    %v557 = vpack.c.b16 %v493, %v491
    %622 = vmatpush.bf16.msra.mxu0 %v508
    %623 = vmatpush.bf16.msra.mxu0 %v506
    %624 = vmatpush.bf16.msra.mxu0 %v504
    %625 = vmatpush.bf16.msra.mxu0 %v502
    %626 = vmatpush.bf16.msra.mxu0 %v500
    %627 = vmatpush.bf16.msra.mxu0 %v498
    %628 = vmatpush.bf16.msra.mxu0 %v496
    %629 = vmatpush.bf16.msra.mxu0 %v494
    %630 = vmatmul.bf16.gmra.mxu0 %v228
    %v631 = vpop.f32.mrf.mxu0
    %v632 = vadd.f32 %v298, %v631
    %v633 = vpop.f32.mrf.mxu0
    %634 = vdwg.mxu0
    %635 = vmatpush.bf16.msra.mxu0 %v524
    %636 = vmatpush.bf16.msra.mxu0 %v522
    %637 = vmatpush.bf16.msra.mxu0 %v520
    %638 = vmatpush.bf16.msra.mxu0 %v518
    %639 = vmatpush.bf16.msra.mxu0 %v516
    %640 = vmatpush.bf16.msra.mxu0 %v514
    %641 = vmatpush.bf16.msra.mxu0 %v512
    %642 = vmatpush.bf16.msra.mxu0 %v510
    %643 = vmatmul.bf16.gmra.mxu0 %v229
    %v644 = vpop.f32.mrf.mxu0
    %v645 = vadd.f32 %v632, %v644
    %v646 = vpop.f32.mrf.mxu0
    %647 = vdwg.mxu0
    %648 = vmatpush.bf16.msra.mxu0 %v540
    %649 = vmatpush.bf16.msra.mxu0 %v538
    %650 = vmatpush.bf16.msra.mxu0 %v536
    %651 = vmatpush.bf16.msra.mxu0 %v534
    %652 = vmatpush.bf16.msra.mxu0 %v532
    %653 = vmatpush.bf16.msra.mxu0 %v530
    %654 = vmatpush.bf16.msra.mxu0 %v528
    %655 = vmatpush.bf16.msra.mxu0 %v526
    %656 = vmatmul.bf16.gmra.mxu0 %v230
    %v657 = vpop.f32.mrf.mxu0
    %v658 = vadd.f32 %v645, %v657
    %v659 = vpop.f32.mrf.mxu0
    %660 = vdwg.mxu0
    %661 = vmatpush.bf16.msra.mxu0 %v556
    %662 = vmatpush.bf16.msra.mxu0 %v554
    %663 = vmatpush.bf16.msra.mxu0 %v552
    %664 = vmatpush.bf16.msra.mxu0 %v550
    %665 = vmatpush.bf16.msra.mxu0 %v548
    %666 = vmatpush.bf16.msra.mxu0 %v546
    %667 = vmatpush.bf16.msra.mxu0 %v544
    %668 = vmatpush.bf16.msra.mxu0 %v542
    %669 = vmatmul.bf16.gmra.mxu0 %v231
    %v670 = vpop.f32.mrf.mxu0
    %v671 = vadd.f32 %v658, %v670
    %v672 = vpop.f32.mrf.mxu0
    %673 = vdwg.mxu0
    %674 = vmatpush.bf16.msra.mxu0 %v509
    %675 = vmatpush.bf16.msra.mxu0 %v507
    %676 = vmatpush.bf16.msra.mxu0 %v505
    %677 = vmatpush.bf16.msra.mxu0 %v503
    %678 = vmatpush.bf16.msra.mxu0 %v501
    %679 = vmatpush.bf16.msra.mxu0 %v499
    %680 = vmatpush.bf16.msra.mxu0 %v497
    %681 = vmatpush.bf16.msra.mxu0 %v495
    %682 = vmatmul.bf16.gmra.mxu0 %v228
    %v683 = vpop.f32.mrf.mxu0
    %v684 = vadd.f32 %v299, %v683
    %v685 = vpop.f32.mrf.mxu0
    %686 = vdwg.mxu0
    %687 = vmatpush.bf16.msra.mxu0 %v525
    %688 = vmatpush.bf16.msra.mxu0 %v523
    %689 = vmatpush.bf16.msra.mxu0 %v521
    %690 = vmatpush.bf16.msra.mxu0 %v519
    %691 = vmatpush.bf16.msra.mxu0 %v517
    %692 = vmatpush.bf16.msra.mxu0 %v515
    %693 = vmatpush.bf16.msra.mxu0 %v513
    %694 = vmatpush.bf16.msra.mxu0 %v511
    %695 = vmatmul.bf16.gmra.mxu0 %v229
    %v696 = vpop.f32.mrf.mxu0
    %v697 = vadd.f32 %v684, %v696
    %v698 = vpop.f32.mrf.mxu0
    %699 = vdwg.mxu0
    %700 = vmatpush.bf16.msra.mxu0 %v541
    %701 = vmatpush.bf16.msra.mxu0 %v539
    %702 = vmatpush.bf16.msra.mxu0 %v537
    %703 = vmatpush.bf16.msra.mxu0 %v535
    %704 = vmatpush.bf16.msra.mxu0 %v533
    %705 = vmatpush.bf16.msra.mxu0 %v531
    %706 = vmatpush.bf16.msra.mxu0 %v529
    %707 = vmatpush.bf16.msra.mxu0 %v527
    %708 = vmatmul.bf16.gmra.mxu0 %v230
    %v709 = vpop.f32.mrf.mxu0
    %v710 = vadd.f32 %v697, %v709
    %v711 = vpop.f32.mrf.mxu0
    %712 = vdwg.mxu0
    %713 = vmatpush.bf16.msra.mxu0 %v557
    %714 = vmatpush.bf16.msra.mxu0 %v555
    %715 = vmatpush.bf16.msra.mxu0 %v553
    %716 = vmatpush.bf16.msra.mxu0 %v551
    %717 = vmatpush.bf16.msra.mxu0 %v549
    %718 = vmatpush.bf16.msra.mxu0 %v547
    %719 = vmatpush.bf16.msra.mxu0 %v545
    %720 = vmatpush.bf16.msra.mxu0 %v543
    %721 = vmatmul.bf16.gmra.mxu0 %v231
    %v722 = vpop.f32.mrf.mxu0
    %v723 = vadd.f32 %v710, %v722
    %v724 = vpop.f32.mrf.mxu0
    %725 = vdwg.mxu0
    %v726 = vmax.f32 %v671, 0.0
    %v727 = vmax.f32 %v723, 0.0
    %v728 = vpack.c.bf16 %v726, %v726
    %v729 = vpack.c.bf16 %v727, %v727
    %v730 = vld [vmem:[#allocation10] sm:$0xf]
    %v731 = vld [vmem:[#allocation10 + $0x4] sm:$0xf]
    %v732 = vld [vmem:[#allocation10 + $0x8] sm:$0xf]
    %v733 = vld [vmem:[#allocation10 + $0xc] sm:$0xf]
    %v734 = vld [vmem:[#allocation10 + $0x10] sm:$0xf]
    %v735 = vld [vmem:[#allocation10 + $0x14] sm:$0xf]
    %v736 = vld [vmem:[#allocation10 + $0x18] sm:$0xf]
    %v737 = vld [vmem:[#allocation10 + $0x1c] sm:$0xf]
    %v738 = vld [vmem:[#allocation10 + $0x20] sm:$0xf]
    %v739 = vld [vmem:[#allocation10 + $0x24] sm:$0xf]
    %v740 = vld [vmem:[#allocation10 + $0x28] sm:$0xf]
    %v741 = vld [vmem:[#allocation10 + $0x2c] sm:$0xf]
    %v742 = vld [vmem:[#allocation10 + $0x30] sm:$0xf]
    %v743 = vld [vmem:[#allocation10 + $0x34] sm:$0xf]
    %v744 = vld [vmem:[#allocation10 + $0x38] sm:$0xf]
    %v745 = vld [vmem:[#allocation10 + $0x3c] sm:$0xf]
    %v746 = vld [vmem:[#allocation10 + $0x40] sm:$0xf]
    %v747 = vld [vmem:[#allocation10 + $0x44] sm:$0xf]
    %v748 = vld [vmem:[#allocation10 + $0x48] sm:$0xf]
    %v749 = vld [vmem:[#allocation10 + $0x4c] sm:$0xf]
    %v750 = vld [vmem:[#allocation10 + $0x50] sm:$0xf]
    %v751 = vld [vmem:[#allocation10 + $0x54] sm:$0xf]
    %v752 = vld [vmem:[#allocation10 + $0x58] sm:$0xf]
    %v753 = vld [vmem:[#allocation10 + $0x5c] sm:$0xf]
    %v754 = vld [vmem:[#allocation10 + $0x60] sm:$0xf]
    %v755 = vld [vmem:[#allocation10 + $0x64] sm:$0xf]
    %v756 = vld [vmem:[#allocation10 + $0x68] sm:$0xf]
    %v757 = vld [vmem:[#allocation10 + $0x6c] sm:$0xf]
    %v758 = vld [vmem:[#allocation10 + $0x70] sm:$0xf]
    %v759 = vld [vmem:[#allocation10 + $0x74] sm:$0xf]
    %v760 = vld [vmem:[#allocation10 + $0x78] sm:$0xf]
    %v761 = vld [vmem:[#allocation10 + $0x7c] sm:$0xf]
    %v762 = vld [vmem:[%s6] sm:$0x1]
    %v764 = vperm.slane %v762, 0
    %v798 = vunpack.c.l.b16 %v730
    %v799 = vunpack.c.l.b16 %v731
    %v800 = vunpack.c.l.b16 %v732
    %v801 = vunpack.c.l.b16 %v733
    %v802 = vunpack.c.l.b16 %v734
    %v803 = vunpack.c.l.b16 %v735
    %v804 = vunpack.c.l.b16 %v736
    %v805 = vunpack.c.l.b16 %v737
    %v806 = vunpack.c.l.b16 %v738
    %v807 = vunpack.c.l.b16 %v739
    %v808 = vunpack.c.l.b16 %v740
    %v809 = vunpack.c.l.b16 %v741
    %v810 = vunpack.c.l.b16 %v742
    %v811 = vunpack.c.l.b16 %v743
    %v812 = vunpack.c.l.b16 %v744
    %v813 = vunpack.c.l.b16 %v745
    %v814 = vunpack.c.l.b16 %v746
    %v815 = vunpack.c.l.b16 %v747
    %v816 = vunpack.c.l.b16 %v748
    %v817 = vunpack.c.l.b16 %v749
    %v818 = vunpack.c.l.b16 %v750
    %v819 = vunpack.c.l.b16 %v751
    %v820 = vunpack.c.l.b16 %v752
    %v821 = vunpack.c.l.b16 %v753
    %v822 = vunpack.c.l.b16 %v754
    %v823 = vunpack.c.l.b16 %v755
    %v824 = vunpack.c.l.b16 %v756
    %v825 = vunpack.c.l.b16 %v757
    %v826 = vunpack.c.l.b16 %v758
    %v827 = vunpack.c.l.b16 %v759
    %v828 = vunpack.c.l.b16 %v760
    %v829 = vunpack.c.l.b16 %v761
    %v830 = vpack.c.b16 %v799, %v798
    %v831 = vpack.c.b16 %v801, %v800
    %v832 = vpack.c.b16 %v803, %v802
    %v833 = vpack.c.b16 %v805, %v804
    %v834 = vpack.c.b16 %v807, %v806
    %v835 = vpack.c.b16 %v809, %v808
    %v836 = vpack.c.b16 %v811, %v810
    %v837 = vpack.c.b16 %v813, %v812
    %v838 = vpack.c.b16 %v815, %v814
    %v839 = vpack.c.b16 %v817, %v816
    %v840 = vpack.c.b16 %v819, %v818
    %v841 = vpack.c.b16 %v821, %v820
    %v842 = vpack.c.b16 %v823, %v822
    %v843 = vpack.c.b16 %v825, %v824
    %v844 = vpack.c.b16 %v827, %v826
    %v845 = vpack.c.b16 %v829, %v828
    %862 = vmatpush.bf16.msra.mxu0 %v837
    %863 = vmatpush.bf16.msra.mxu0 %v836
    %864 = vmatpush.bf16.msra.mxu0 %v835
    %865 = vmatpush.bf16.msra.mxu0 %v834
    %866 = vmatpush.bf16.msra.mxu0 %v833
    %867 = vmatpush.bf16.msra.mxu0 %v832
    %868 = vmatpush.bf16.msra.mxu0 %v831
    %869 = vmatpush.bf16.msra.mxu0 %v830
    %870 = vmatmul.bf16.gmra.mxu0 %v728
    %v871 = vpop.f32.mrf.mxu0
    %v872 = vadd.f32 %v764, %v871
    %v873 = vpop.f32.mrf.mxu0
    %874 = vdwg.mxu0
    %875 = vmatpush.bf16.msra.mxu0 %v845
    %876 = vmatpush.bf16.msra.mxu0 %v844
    %877 = vmatpush.bf16.msra.mxu0 %v843
    %878 = vmatpush.bf16.msra.mxu0 %v842
    %879 = vmatpush.bf16.msra.mxu0 %v841
    %880 = vmatpush.bf16.msra.mxu0 %v840
    %881 = vmatpush.bf16.msra.mxu0 %v839
    %882 = vmatpush.bf16.msra.mxu0 %v838
    %883 = vmatmul.bf16.gmra.mxu0 %v729
    %v884 = vpop.f32.mrf.mxu0
    %v885 = vadd.f32 %v872, %v884
    %v886 = vpop.f32.mrf.mxu0
    %887 = vdwg.mxu0
    %v888 = vmax.f32 %v885, 0.0
    %v889 = vld [vmem:[%s7] sm:$0xf]
    %v890 = vpack.c.bf16 %v888, %v888
    %v891 = vld [vmem:[%s8] sm:$0xff]
    %893 = vset.pattern.permute.xlu0 0
    %894 = vperm.xlu0 %893, %v891
    %v895 = vpop.permute.xlu0 %894
    %897 = vmatpush.bf16.xpose.msra.mxu0 0
    %898 = vmatpush.bf16.xpose.msra.mxu0 0
    %899 = vmatpush.bf16.xpose.msra.mxu0 0
    %900 = vmatpush.bf16.xpose.msra.mxu0 0
    %901 = vmatpush.bf16.xpose.msra.mxu0 0
    %902 = vmatpush.bf16.xpose.msra.mxu0 0
    %903 = vmatpush.bf16.xpose.msra.mxu0 0
    %904 = vmatpush.bf16.xpose.msra.mxu0 %v890
    %905 = vmatmul.bf16.gmra.mxu0 %v889
    %v906 = vpop.f32.mrf.mxu0
    %v907 = vadd.f32 %v895, %v906
    %v908 = vpop.f32.mrf.mxu0
    %909 = vdwg.mxu0
    %vm910 = vcmask 64512
    %911 = vst.msk [vmem:[#allocation11] sm:$0xff] %vm910, %v907
    // Predicated region
    $region58: #{tpu_custom_call.1} parent=1 // pred_check
      _
    $region59: #{tpu_custom_call.1} parent=1 // pred_check_branch
      %913 = sbr.rel (0) target = $region61
    $region60: #{tpu_custom_call.1} parent=1 // pred_region
      %915 = vsyncadd [#allocation4], 0
      %s917 = sshll.u32 [#allocation11], 4
      %s918 = int_to_ptr.vmem [resolvable:$true] %s917
      %s919 = sshll.u32 %s9, 4
      %s920 = int_to_ptr.hbm [resolvable:$true] %s919
      %922 = dma.vmem_to_hbm [thread:$0]  %s918, 128, %s920, [#allocation4]
    $region61: #{tpu_custom_call.1} parent=1 // pred_fallthru
      _
    // Predicated region
    $region62: #{tpu_custom_call.1} parent=1 // pred_check
      _
    $region63: #{tpu_custom_call.1} parent=1 // pred_check_branch
      %924 = sbr.rel (0) target = $region65
    $region64: #{tpu_custom_call.1} parent=1 // pred_region
      %926 = dma.done [#allocation4], 128
    $region65: #{tpu_custom_call.1} parent=1 // pred_fallthru
      _
    %927 = vsyncpa [#allocation3], 1
    %928 = vsyncpa [#allocation6], 1
    %929 = vsyncpa [#allocation9], 1
    %930 = vsyncpa [#allocation4], 1

</llo_original>
